<compile_context>
chip_gen: v7x
topology: tpu7x:2x2x1
jax: 0.10.0
libtpu: 0.0.40
codegen_flags: <defaults>
</compile_context>

<pallas_src>
import functools

import jax
import jax.numpy as jnp
from jax.experimental import pallas as pl
from jax.experimental.pallas import tpu as pltpu


def _round_up(v, m):
    return (v + m - 1) // m * m


@functools.lru_cache(maxsize=None)
def _vmem_limit_bytes():
    """Per-generation VMEM limit (~85% of physical), conservative fallback."""
    cap = 64 * 1024 * 1024
    try:
        info = pltpu.get_tpu_info()
        cap = int(getattr(info, "vmem_capacity_bytes", cap))
    except Exception:
        pass
    return max(32 * 1024 * 1024, int(cap * 0.85))


@functools.lru_cache(maxsize=None)
def _buffered_resident_supported():
    """Probe whether pipeline_mode=pl.Buffered(1) works on this JAX/TPU."""
    def probe_kernel(x_ref, o_ref):
        o_ref[...] = x_ref[...] + 1.0

    try:
        def spec():
            return pl.BlockSpec((8, 128), lambda l: (0, 0),
                                pipeline_mode=pl.Buffered(1))
        fn = pl.pallas_call(
            probe_kernel,
            out_shape=jax.ShapeDtypeStruct((8, 128), jnp.float32),
            grid=(2,),
            in_specs=[spec()],
            out_specs=spec(),
            compiler_params=pltpu.CompilerParams(
                dimension_semantics=("arbitrary",)),
        )
        x = jnp.zeros((8, 128), jnp.float32)
        y = jax.block_until_ready(fn(x))
        return bool(jnp.allclose(y, x + 1.0))
    except Exception:
        return False


def fused_gcn_kernel(adj_ref, t0_ref, nsrc_ref, ndst_ref, w_ref, b_ref,
                     o_ref, h_ref, t_ref):
    """One grid step == one GCN layer. Activations persist in h_ref (VMEM)."""
    layer = pl.program_id(0)
    last = pl.num_programs(0) - 1

    @pl.when(layer == 0)
    def _():
        # Layer-0 transform (X * D_src^-1/2) @ W_0 was hoisted to the wrapper.
        t_ref[...] = t0_ref[...]

    @pl.when(layer != 0)
    def _():
        h = h_ref[...].astype(jnp.float32)                    # (NP, HP) f32
        scaled = (h * nsrc_ref[...]).astype(w_ref.dtype)      # fold D_src^-1/2
        t_ref[...] = jnp.dot(scaled, w_ref[...],
                             preferred_element_type=jnp.float32
                             ).astype(t_ref.dtype)            # bf16 transform

    # N^2 aggregation on the MXU: bf16 operands, f32 accumulation.
    agg = jnp.dot(adj_ref[...], t_ref[...],
                  preferred_element_type=jnp.float32)         # (NP, HP) f32
    z = ndst_ref[...] * agg + b_ref[...]                      # D_dst^-1/2 + bias

    @pl.when(layer != last)
    def _():
        h_ref[...] = jnp.maximum(z, 0.0).astype(h_ref.dtype)  # ReLU between layers

    @pl.when(layer == last)
    def _():
        o_ref[...] = z.astype(o_ref.dtype)                    # no ReLU on last layer


def gcn_forward(adj, x, params, *, agg_dtype=jnp.bfloat16):
    """GCN forward: params = [(W_0, b_0), ..., (W_{L-1}, b_{L-1})]."""
    n = adj.shape[0]
    hid = params[0][0].shape[1]
    num_layers = len(params)

    np_ = _round_up(max(n, 8), 128)                 # lane/sublane aligned nodes
    hp = _round_up(hid, 128)                        # lane-dense hidden width

    adj = adj.astype(jnp.float32)
    # 'both' normalization vectors, computed once (not once per layer).
    deg_dst = jnp.sum(adj, axis=1, keepdims=True)   # in-degree  of destination
    deg_src = jnp.sum(adj, axis=0)[:, None]         # out-degree of source
    norm_dst = jnp.where(deg_dst > 0, jax.lax.rsqrt(deg_dst), 0.0)
    norm_src = jnp.where(deg_src > 0, jax.lax.rsqrt(deg_src), 0.0)

    # Layer-0 transform hoisted to one XLA matmul (bf16 operands, f32 acc).
    w0, _ = params[0]
    t0 = jnp.dot((x.astype(jnp.float32) * norm_src).astype(agg_dtype),
                 w0.astype(agg_dtype),
                 preferred_element_type=jnp.float32)          # (N, hid)

    # Zero-pad to lane-dense shapes (exact-zero padding keeps the math
    # identical; padded rows/cols are sliced off at the end).
    adj_p = jnp.pad(adj, ((0, np_ - n), (0, np_ - n))).astype(agg_dtype)
    t0_p = jnp.pad(t0, ((0, np_ - n), (0, hp - hid))).astype(agg_dtype)
    nsrc_p = jnp.pad(norm_src, ((0, np_ - n), (0, 0)))
    ndst_p = jnp.pad(norm_dst, ((0, np_ - n), (0, 0)))

    # Per-layer weights: only layers >= 1 are needed in-kernel (HP x HP, bf16);
    # biases for all layers (f32).
    w_stack, b_stack = [], []
    for li, (w, b) in enumerate(params):
        b = b.astype(jnp.float32).reshape(1, -1)
        b_stack.append(jnp.pad(b, ((0, 0), (0, hp - b.shape[-1]))))
        if li >= 1:
            w = w.astype(jnp.float32)
            w_stack.append(jnp.pad(w, ((0, hp - w.shape[0]),
                                       (0, hp - w.shape[1]))))
    if not w_stack:                                   # single-layer model
        w_stack.append(jnp.zeros((hp, hp), jnp.float32))   # dummy, never read
    w_stack = jnp.stack(w_stack).astype(agg_dtype)    # (max(L-1,1), HP, HP)
    b_stack = jnp.stack(b_stack)                      # (L, 1, HP)

    use_b1 = _buffered_resident_supported()

    def resident(shape):                              # same block every layer
        if use_b1:
            return pl.BlockSpec(shape, lambda l: (0,) * len(shape),
                                pipeline_mode=pl.Buffered(1))
        return pl.BlockSpec(shape, lambda l: (0,) * len(shape))

    flops = (2 * num_layers * np_ * np_ * hp
             + 2 * max(num_layers - 1, 0) * np_ * hp * hp)
    bytes_accessed = (adj_p.size * 2 + t0_p.size * 2 + w_stack.size * 2
                      + b_stack.size * 4 + (nsrc_p.size + ndst_p.size) * 4
                      + np_ * hp * 4)
    cost = pl.CostEstimate(flops=flops, transcendentals=0,
                           bytes_accessed=int(bytes_accessed))

    out_p = pl.pallas_call(
        fused_gcn_kernel,
        out_shape=jax.ShapeDtypeStruct((np_, hp), jnp.float32),
        grid=(num_layers,),
        in_specs=[
            resident((np_, np_)),                               # adjacency (bf16)
            resident((np_, hp)),                                # t0 (bf16)
            resident((np_, 1)),                                 # D_src^{-1/2}
            resident((np_, 1)),                                 # D_dst^{-1/2}
            pl.BlockSpec((None, hp, hp),
                         lambda l: (jnp.maximum(l - 1, 0), 0, 0)),  # W_l (l>=1)
            pl.BlockSpec((None, 1, hp), lambda l: (l, 0, 0)),       # b_l
        ],
        out_specs=resident((np_, hp)),
        scratch_shapes=[pltpu.VMEM((np_, hp), agg_dtype),       # resident h
                        pltpu.VMEM((np_, hp), agg_dtype)],      # per-layer t
        compiler_params=pltpu.CompilerParams(
            dimension_semantics=("arbitrary",),    # layers are sequential
            vmem_limit_bytes=_vmem_limit_bytes()),
        cost_estimate=cost,
    )(adj_p, t0_p, nsrc_p, ndst_p, w_stack, b_stack)
    return out_p[:n, :hid]


def glorot_uniform(key, shape):
    fan_in, fan_out = shape
    limit = (6.0 / (fan_in + fan_out)) ** 0.5
    return jax.random.uniform(key, shape, jnp.float32, -limit, limit)


def init_gcn_params(key, in_dim, hid_dim, num_layers):
    """Deterministic init matching GraphConv: glorot-uniform weight, zero bias."""
    params = []
    for i in range(num_layers):
        d_in = in_dim if i == 0 else hid_dim
        key, wk = jax.random.split(key)
        w = glorot_uniform(wk, (d_in, hid_dim))
        b = jnp.zeros((1, hid_dim), jnp.float32)
        params.append((w, b))
    return params


def gcn_reference(adj, x, params):
    """Pure-JAX f32 reference (D_dst^-1/2 A D_src^-1/2 (X W) + b, ReLU between)."""
    deg_dst = jnp.sum(adj, axis=1, keepdims=True)
    deg_src = jnp.sum(adj, axis=0, keepdims=True)
    ndst = jnp.where(deg_dst > 0, jax.lax.rsqrt(deg_dst), 0.0)
    nsrc = jnp.where(deg_src > 0, jax.lax.rsqrt(deg_src), 0.0)
    ahat = ndst * adj * nsrc
    h = x
    for i, (w, b) in enumerate(params):
        h = ahat @ (h @ w) + b
        if i != len(params) - 1:
            h = jnp.maximum(h, 0.0)
    return h


if __name__ == "__main__":
    N, IN_DIM, HID_DIM, NUM_LAYERS = 16, 8, 32, 2

    key = jax.random.PRNGKey(0)
    k_adj, k_x, k_params = jax.random.split(key, 3)

    # Synthetic undirected graph with self loops (avoids zero degrees).
    a = (jax.random.uniform(k_adj, (N, N)) < 0.3).astype(jnp.float32)
    adj = jnp.maximum(a, a.T)
    adj = jnp.maximum(adj, jnp.eye(N, dtype=jnp.float32))

    x = jax.random.normal(k_x, (N, IN_DIM), jnp.float32)
    params = init_gcn_params(k_params, IN_DIM, HID_DIM, NUM_LAYERS)

    out = jax.jit(gcn_forward)(adj, x, params)
    jax.block_until_ready(out)

    assert out.shape == (N, HID_DIM) and out.dtype == jnp.float32
    ref = gcn_reference(adj, x, params)
    assert jnp.allclose(out, ref, rtol=5e-2, atol=5e-2), (
        float(jnp.max(jnp.abs(out - ref))))
    print("KERNEL_OK")
</pallas_src>

<mosaic_0001>
module attributes {stable_mosaic.version = 11 : i64} {
  func.func @fused_gcn_kernel(%arg0: i32, %arg1: memref<128x128xbf16, #tpu.memory_space<vmem>>, %arg2: memref<128x128xbf16, #tpu.memory_space<vmem>>, %arg3: memref<128x1xf32, #tpu.memory_space<vmem>>, %arg4: memref<128x1xf32, #tpu.memory_space<vmem>>, %arg5: memref<1x128x128xbf16, #tpu.memory_space<vmem>>, %arg6: memref<1x1x128xf32, #tpu.memory_space<vmem>>, %arg7: memref<128x128xf32, #tpu.memory_space<vmem>>, %arg8: memref<128x128xbf16, #tpu.memory_space<vmem>>, %arg9: memref<128x128xbf16, #tpu.memory_space<vmem>>) attributes {dimension_semantics = [#tpu.dimension_semantics<arbitrary>], iteration_bounds = array<i64: 2>, scalar_prefetch = 0 : i64, scratch_operands = 2 : i64, tpu.core_type = #tpu.core_type<tc>, window_params = [{pipeline_mode = #tpu.pipeline_mode<synchronous>, transform_indices = @transform_0, window_bounds = array<i64: 128, 128>}, {pipeline_mode = #tpu.pipeline_mode<synchronous>, transform_indices = @transform_1, window_bounds = array<i64: 128, 128>}, {pipeline_mode = #tpu.pipeline_mode<synchronous>, transform_indices = @transform_2, window_bounds = array<i64: 128, 1>}, {pipeline_mode = #tpu.pipeline_mode<synchronous>, transform_indices = @transform_3, window_bounds = array<i64: 128, 1>}, {transform_indices = @transform_4, window_bounds = array<i64: 1, 128, 128>}, {transform_indices = @transform_5, window_bounds = array<i64: 1, 1, 128>}, {pipeline_mode = #tpu.pipeline_mode<synchronous>, transform_indices = @transform_6, window_bounds = array<i64: 128, 128>}]} {
    %c0_i32 = arith.constant 0 : i32
    %0 = arith.cmpi eq, %arg0, %c0_i32 : i32
    %1 = arith.extui %0 : i1 to i32
    %c0_i32_0 = arith.constant 0 : i32
    %2 = arith.cmpi ne, %1, %c0_i32_0 : i32
    scf.if %2 {
      %c0_14 = arith.constant 0 : index
      %c0_15 = arith.constant 0 : index
      %22 = vector.load %arg2[%c0_14, %c0_15] : memref<128x128xbf16, #tpu.memory_space<vmem>>, vector<128x128xbf16>
      %c0_16 = arith.constant 0 : index
      %c0_17 = arith.constant 0 : index
      %23 = vector.load %arg9[%c0_16, %c0_17] : memref<128x128xbf16, #tpu.memory_space<vmem>>, vector<128x128xbf16>
      tpu.vector_store %arg9[%c0_16, %c0_17], %22 {strides = array<i32>} : memref<128x128xbf16, #tpu.memory_space<vmem>>, vector<128x128xbf16>,
    } else {
    }
    %c0_i32_1 = arith.constant 0 : i32
    %3 = arith.cmpi ne, %arg0, %c0_i32_1 : i32
    %4 = arith.extui %3 : i1 to i32
    %c0_i32_2 = arith.constant 0 : i32
    %5 = arith.cmpi ne, %4, %c0_i32_2 : i32
    scf.if %5 {
      %c0_14 = arith.constant 0 : index
      %c0_15 = arith.constant 0 : index
      %22 = vector.load %arg8[%c0_14, %c0_15] : memref<128x128xbf16, #tpu.memory_space<vmem>>, vector<128x128xbf16>
      %23 = arith.extf %22 : vector<128x128xbf16> to vector<128x128xf32>
      %c0_16 = arith.constant 0 : index
      %c0_17 = arith.constant 0 : index
      %24 = vector.load %arg3[%c0_16, %c0_17] : memref<128x1xf32, #tpu.memory_space<vmem>>, vector<128x1xf32>
      %25 = vector.broadcast %24 : vector<128x1xf32> to vector<128x128xf32>
      %26 = arith.mulf %23, %25 : vector<128x128xf32>
      %27 = arith.truncf %26 : vector<128x128xf32> to vector<128x128xbf16>
      %c0_18 = arith.constant 0 : index
      %c0_19 = arith.constant 0 : index
      %c0_20 = arith.constant 0 : index
      %28 = vector.load %arg5[%c0_18, %c0_19, %c0_20] : memref<1x128x128xbf16, #tpu.memory_space<vmem>>, vector<1x128x128xbf16>
      %29 = vector.shape_cast %28 : vector<1x128x128xbf16> to vector<128x128xbf16>
      %cst_21 = arith.constant dense<0.000000e+00> : vector<128x128xf32>
      %30 = tpu.matmul %27, %29, %cst_21 {dimension_numbers = #tpu.dot_dimension_numbers<[1], [0], [0], [1], [0, 0, 1, 1], [], []>} : vector<128x128xbf16>, vector<128x128xbf16>, vector<128x128xf32> -> vector<128x128xf32>
      %31 = arith.truncf %30 : vector<128x128xf32> to vector<128x128xbf16>
      %c0_22 = arith.constant 0 : index
      %c0_23 = arith.constant 0 : index
      %32 = vector.load %arg9[%c0_22, %c0_23] : memref<128x128xbf16, #tpu.memory_space<vmem>>, vector<128x128xbf16>
      tpu.vector_store %arg9[%c0_22, %c0_23], %31 {strides = array<i32>} : memref<128x128xbf16, #tpu.memory_space<vmem>>, vector<128x128xbf16>,
    } else {
    }
    %c0 = arith.constant 0 : index
    %c0_3 = arith.constant 0 : index
    %6 = vector.load %arg1[%c0, %c0_3] : memref<128x128xbf16, #tpu.memory_space<vmem>>, vector<128x128xbf16>
    %c0_4 = arith.constant 0 : index
    %c0_5 = arith.constant 0 : index
    %7 = vector.load %arg9[%c0_4, %c0_5] : memref<128x128xbf16, #tpu.memory_space<vmem>>, vector<128x128xbf16>
    %cst = arith.constant dense<0.000000e+00> : vector<128x128xf32>
    %8 = tpu.matmul %6, %7, %cst {dimension_numbers = #tpu.dot_dimension_numbers<[1], [0], [0], [1], [0, 0, 1, 1], [], []>} : vector<128x128xbf16>, vector<128x128xbf16>, vector<128x128xf32> -> vector<128x128xf32>
    %c0_6 = arith.constant 0 : index
    %c0_7 = arith.constant 0 : index
    %9 = vector.load %arg4[%c0_6, %c0_7] : memref<128x1xf32, #tpu.memory_space<vmem>>, vector<128x1xf32>
    %10 = vector.broadcast %9 : vector<128x1xf32> to vector<128x128xf32>
    %11 = arith.mulf %10, %8 : vector<128x128xf32>
    %c0_8 = arith.constant 0 : index
    %c0_9 = arith.constant 0 : index
    %c0_10 = arith.constant 0 : index
    %12 = vector.load %arg6[%c0_8, %c0_9, %c0_10] : memref<1x1x128xf32, #tpu.memory_space<vmem>>, vector<1x1x128xf32>
    %13 = vector.shape_cast %12 : vector<1x1x128xf32> to vector<1x128xf32>
    %14 = vector.broadcast %13 : vector<1x128xf32> to vector<128x128xf32>
    %15 = arith.addf %11, %14 : vector<128x128xf32>
    %c1_i32 = arith.constant 1 : i32
    %16 = arith.cmpi ne, %arg0, %c1_i32 : i32
    %17 = arith.extui %16 : i1 to i32
    %c0_i32_11 = arith.constant 0 : i32
    %18 = arith.cmpi ne, %17, %c0_i32_11 : i32
    scf.if %18 {
      %cst_14 = arith.constant 0.000000e+00 : f32
      %22 = vector.broadcast %cst_14 : f32 to vector<128x128xf32>
      %23 = arith.maximumf %15, %22 : vector<128x128xf32>
      %24 = arith.truncf %23 : vector<128x128xf32> to vector<128x128xbf16>
      %c0_15 = arith.constant 0 : index
      %c0_16 = arith.constant 0 : index
      %25 = vector.load %arg8[%c0_15, %c0_16] : memref<128x128xbf16, #tpu.memory_space<vmem>>, vector<128x128xbf16>
      tpu.vector_store %arg8[%c0_15, %c0_16], %24 {strides = array<i32>} : memref<128x128xbf16, #tpu.memory_space<vmem>>, vector<128x128xbf16>,
    } else {
    }
    %c1_i32_12 = arith.constant 1 : i32
    %19 = arith.cmpi eq, %arg0, %c1_i32_12 : i32
    %20 = arith.extui %19 : i1 to i32
    %c0_i32_13 = arith.constant 0 : i32
    %21 = arith.cmpi ne, %20, %c0_i32_13 : i32
    scf.if %21 {
      %c0_14 = arith.constant 0 : index
      %c0_15 = arith.constant 0 : index
      %22 = vector.load %arg7[%c0_14, %c0_15] : memref<128x128xf32, #tpu.memory_space<vmem>>, vector<128x128xf32>
      tpu.vector_store %arg7[%c0_14, %c0_15], %15 {strides = array<i32>} : memref<128x128xf32, #tpu.memory_space<vmem>>, vector<128x128xf32>,
    } else {
    }
    return
  }
  func.func @transform_0(%arg0: i32) -> (i32, i32) {
    %c0_i32 = arith.constant 0 : i32
    %c0_i32_0 = arith.constant 0 : i32
    %c0_i32_1 = arith.constant 0 : i32
    return %c0_i32, %c0_i32_0 : i32, i32
  }
  func.func @transform_1(%arg0: i32) -> (i32, i32) {
    %c0_i32 = arith.constant 0 : i32
    %c0_i32_0 = arith.constant 0 : i32
    %c0_i32_1 = arith.constant 0 : i32
    return %c0_i32, %c0_i32_0 : i32, i32
  }
  func.func @transform_2(%arg0: i32) -> (i32, i32) {
    %c0_i32 = arith.constant 0 : i32
    %c0_i32_0 = arith.constant 0 : i32
    %c0_i32_1 = arith.constant 0 : i32
    return %c0_i32, %c0_i32_0 : i32, i32
  }
  func.func @transform_3(%arg0: i32) -> (i32, i32) {
    %c0_i32 = arith.constant 0 : i32
    %c0_i32_0 = arith.constant 0 : i32
    %c0_i32_1 = arith.constant 0 : i32
    return %c0_i32, %c0_i32_0 : i32, i32
  }
  func.func @transform_4(%arg0: i32) -> (i32, i32, i32) {
    %c1_i32 = arith.constant 1 : i32
    %0 = arith.subi %arg0, %c1_i32 : i32
    %c0_i32 = arith.constant 0 : i32
    %1 = arith.maxsi %0, %c0_i32 : i32
    %c0_i32_0 = arith.constant 0 : i32
    %c0_i32_1 = arith.constant 0 : i32
    %c0_i32_2 = arith.constant 0 : i32
    return %1, %c0_i32_0, %c0_i32_1 : i32, i32, i32
  }
  func.func @transform_5(%arg0: i32) -> (i32, i32, i32) {
    %c0_i32 = arith.constant 0 : i32
    %c0_i32_0 = arith.constant 0 : i32
    %c0_i32_1 = arith.constant 0 : i32
    return %arg0, %c0_i32, %c0_i32_0 : i32, i32, i32
  }
  func.func @transform_6(%arg0: i32) -> (i32, i32) {
    %c0_i32 = arith.constant 0 : i32
    %c0_i32_0 = arith.constant 0 : i32
    %c0_i32_1 = arith.constant 0 : i32
    return %c0_i32, %c0_i32_0 : i32, i32
  }
}

</mosaic_0001>

<llo_original>
// kernel: gcn_forward.1
$region0: #{gcn_forward.1}
  #allocation0 [shape = 'u32[]', space=smem, size = 0x4, offset = 0x4, fixed_abs, tag = 'smem constant byte address 0x4 - core index']
  #allocation1 [shape = 'u32[144,128]{1,0:T(1,128)}', space=vmem, size = 0x12000, scoped, tag = 'internal scratch']
  #allocation2 [shape = 'bf16[128,128]{1,0:T(16,128)(2,1)}', space=vmem, size = 0x8000, scoped, tag = 'scratch operand']
  #allocation3 [shape = 'bf16[128,128]{1,0:T(16,128)(2,1)}', space=vmem, size = 0x8000, scoped, tag = 'scratch operand']
  %s0 = inlined_call_operand.vmem [shape: bf16[128,128], index: 0, kind: input, shape index: {}]
  %s1 = inlined_call_operand.vmem [shape: bf16[128,128], index: 1, kind: input, shape index: {}]
  %s2 = inlined_call_operand.vmem [shape: f32[128,1], index: 2, kind: input, shape index: {}]
  %s3 = inlined_call_operand.vmem [shape: f32[128,1], index: 3, kind: input, shape index: {}]
  %s4 = inlined_call_operand.vmem [shape: bf16[1,128,128], index: 4, kind: input, shape index: {}]
  %s5 = inlined_call_operand.vmem [shape: f32[2,1,128], index: 5, kind: input, shape index: {}]
  %s6 = inlined_call_operand.vmem [shape: f32[128,128], index: 6, kind: output, shape index: {}]
  %s7 = sld [smem:[#allocation0]]
  $region73: #{gcn_forward.1} parent=0
    _
  %s9 = ssub.s32 1, %s7
  %s10 = scalar_select 0, %s9, %s7
  loop: start=0, step=1, limit=4
  $region2: #{gcn_forward.1} parent=0 // loop_pre_header
    _
  $region3: #{gcn_forward.1} parent=0 // loop_header
    %s12 = sphi 0, %s16
    %p13 = scmp.ge.s32.totalorder %s12, 4
    %s20 = sphi 0, %s20
    %s22 = sphi 0, %s20
    %s23 = sphi 0, %s22
    %s37 = sphi 0, %s23
    %s41 = sphi 0, %s41
    %s43 = sphi 0, %s41
    %s44 = sphi 0, %s43
    %s58 = sphi 0, %s44
    %s62 = sphi 0, %s62
    %s64 = sphi 0, %s62
    %s65 = sphi 0, %s64
    %s79 = sphi 0, %s65
    %s83 = sphi 0, %s83
    %s85 = sphi 0, %s83
    %s86 = sphi 0, %s85
    %s100 = sphi 0, %s86
    %s112 = sphi 0, %s114
    %s115 = sphi 0, %s112
    %s116 = sphi 0, %s115
    %s132 = sphi 0, %s116
    %s138 = sphi 0, %s140
    %s141 = sphi 0, %s138
    %s142 = sphi 0, %s141
    %s158 = sphi 0, %s142
    %s162 = sphi 0, %s162
    %s164 = sphi 0, %s162
    %s165 = sphi 0, %s164
    %s179 = sphi 0, %s165
  $region4: #{gcn_forward.1} parent=0 // loop_header_branch
    %15 = sbr.rel (%p13) target = $region8
  $region5: #{gcn_forward.1} parent=0 // loop_body
    %s17 = ssub.s32 %s12, 1
    %s18 = ssub.s32 %s12, 2
    %s19 = sadd.s32 %s12, 1
    %s21 = sadd.s32 %s20, 1
    %p24 = scmp.eq.s32.totalorder %s12, 1
    %p25 = scmp.ne.s32.totalorder %s20, %s22
    %p26 = scmp.eq.s32.totalorder %s12, 0
    %p27 = por %p25, %p26
    %p28 = scmp.ne.s32.totalorder %s20, %s22
    %p29 = scmp.eq.s32.totalorder %s17, 1
    %p30 = por %p28, %p29
    %p31 = scmp.ne.s32.totalorder %s22, %s23
    %p32 = scmp.eq.s32.totalorder %s17, 0
    %p33 = por %p31, %p32
    %p34 = scmp.ne.s32.totalorder %s22, %s23
    %p35 = scmp.eq.s32.totalorder %s18, 1
    %p36 = por %p34, %p35
    %p38 = scmp.ne.s32.totalorder %s23, %s37
    %p39 = scmp.eq.s32.totalorder %s18, 0
    %p40 = por %p38, %p39
    %s42 = sadd.s32 %s41, 1
    %p45 = scmp.eq.s32.totalorder %s12, 1
    %p46 = scmp.ne.s32.totalorder %s41, %s43
    %p47 = scmp.eq.s32.totalorder %s12, 0
    %p48 = por %p46, %p47
    %p49 = scmp.ne.s32.totalorder %s41, %s43
    %p50 = scmp.eq.s32.totalorder %s17, 1
    %p51 = por %p49, %p50
    %p52 = scmp.ne.s32.totalorder %s43, %s44
    %p53 = scmp.eq.s32.totalorder %s17, 0
    %p54 = por %p52, %p53
    %p55 = scmp.ne.s32.totalorder %s43, %s44
    %p56 = scmp.eq.s32.totalorder %s18, 1
    %p57 = por %p55, %p56
    %p59 = scmp.ne.s32.totalorder %s44, %s58
    %p60 = scmp.eq.s32.totalorder %s18, 0
    %p61 = por %p59, %p60
    %s63 = sadd.s32 %s62, 1
    %p66 = scmp.eq.s32.totalorder %s12, 1
    %p67 = scmp.ne.s32.totalorder %s62, %s64
    %p68 = scmp.eq.s32.totalorder %s12, 0
    %p69 = por %p67, %p68
    %p70 = scmp.ne.s32.totalorder %s62, %s64
    %p71 = scmp.eq.s32.totalorder %s17, 1
    %p72 = por %p70, %p71
    %p73 = scmp.ne.s32.totalorder %s64, %s65
    %p74 = scmp.eq.s32.totalorder %s17, 0
    %p75 = por %p73, %p74
    %p76 = scmp.ne.s32.totalorder %s64, %s65
    %p77 = scmp.eq.s32.totalorder %s18, 1
    %p78 = por %p76, %p77
    %p80 = scmp.ne.s32.totalorder %s65, %s79
    %p81 = scmp.eq.s32.totalorder %s18, 0
    %p82 = por %p80, %p81
    %s84 = sadd.s32 %s83, 1
    %p87 = scmp.eq.s32.totalorder %s12, 1
    %p88 = scmp.ne.s32.totalorder %s83, %s85
    %p89 = scmp.eq.s32.totalorder %s12, 0
    %p90 = por %p88, %p89
    %p91 = scmp.ne.s32.totalorder %s83, %s85
    %p92 = scmp.eq.s32.totalorder %s17, 1
    %p93 = por %p91, %p92
    %p94 = scmp.ne.s32.totalorder %s85, %s86
    %p95 = scmp.eq.s32.totalorder %s17, 0
    %p96 = por %p94, %p95
    %p97 = scmp.ne.s32.totalorder %s85, %s86
    %p98 = scmp.eq.s32.totalorder %s18, 1
    %p99 = por %p97, %p98
    %p101 = scmp.ne.s32.totalorder %s86, %s100
    %p102 = scmp.eq.s32.totalorder %s18, 0
    %p103 = por %p101, %p102
    %s104 = ssub.s32 %s12, 1
    %p105 = scmp.gt.s32.totalorder %s104, 0
    %s106 = scalar_select %p105, %s104, 0
    %s107 = ssub.s32 %s19, 1
    %p108 = scmp.gt.s32.totalorder %s107, 0
    %s109 = scalar_select %p108, %s107, 0
    %s110 = ssub.s32 %s106, %s109
    %p111 = scmp.eq.s32.totalorder %s110, 0
    %s113 = sadd.s32 %s112, 1
    %s114 = scalar_select %p111, %s112, %s113
    %p117 = pneg %p111
    %p118 = scmp.eq.s32.totalorder %s12, 1
    %p119 = por %p117, %p118
    %p120 = scmp.ne.s32.totalorder %s112, %s115
    %p121 = scmp.eq.s32.totalorder %s12, 0
    %p122 = por %p120, %p121
    %p123 = scmp.ne.s32.totalorder %s112, %s115
    %p124 = scmp.eq.s32.totalorder %s17, 1
    %p125 = por %p123, %p124
    %p126 = scmp.ne.s32.totalorder %s115, %s116
    %p127 = scmp.eq.s32.totalorder %s17, 0
    %p128 = por %p126, %p127
    %p129 = scmp.ne.s32.totalorder %s115, %s116
    %p130 = scmp.eq.s32.totalorder %s18, 1
    %p131 = por %p129, %p130
    %p133 = scmp.ne.s32.totalorder %s116, %s132
    %p134 = scmp.eq.s32.totalorder %s18, 0
    %p135 = por %p133, %p134
    %s136 = ssub.s32 %s12, %s19
    %p137 = scmp.eq.s32.totalorder %s136, 0
    %s139 = sadd.s32 %s138, 1
    %s140 = scalar_select %p137, %s138, %s139
    %p143 = pneg %p137
    %p144 = scmp.eq.s32.totalorder %s12, 1
    %p145 = por %p143, %p144
    %p146 = scmp.ne.s32.totalorder %s138, %s141
    %p147 = scmp.eq.s32.totalorder %s12, 0
    %p148 = por %p146, %p147
    %p149 = scmp.ne.s32.totalorder %s138, %s141
    %p150 = scmp.eq.s32.totalorder %s17, 1
    %p151 = por %p149, %p150
    %p152 = scmp.ne.s32.totalorder %s141, %s142
    %p153 = scmp.eq.s32.totalorder %s17, 0
    %p154 = por %p152, %p153
    %p155 = scmp.ne.s32.totalorder %s141, %s142
    %p156 = scmp.eq.s32.totalorder %s18, 1
    %p157 = por %p155, %p156
    %p159 = scmp.ne.s32.totalorder %s142, %s158
    %p160 = scmp.eq.s32.totalorder %s18, 0
    %p161 = por %p159, %p160
    %s163 = sadd.s32 %s162, 1
    %p166 = scmp.eq.s32.totalorder %s12, 1
    %p167 = scmp.ne.s32.totalorder %s162, %s164
    %p168 = scmp.eq.s32.totalorder %s12, 0
    %p169 = por %p167, %p168
    %p170 = scmp.ne.s32.totalorder %s162, %s164
    %p171 = scmp.eq.s32.totalorder %s17, 1
    %p172 = por %p170, %p171
    %p173 = scmp.ne.s32.totalorder %s164, %s165
    %p174 = scmp.eq.s32.totalorder %s17, 0
    %p175 = por %p173, %p174
    %p176 = scmp.ne.s32.totalorder %s164, %s165
    %p177 = scmp.eq.s32.totalorder %s18, 1
    %p178 = por %p176, %p177
    %p180 = scmp.ne.s32.totalorder %s165, %s179
    %p181 = scmp.eq.s32.totalorder %s18, 0
    %p182 = por %p180, %p181
    %p183 = scmp.le.s32.totalorder 1, %s12
    %p184 = scmp.lt.s32.totalorder %s12, 3
    %p185 = pnand %p183, %p184
    %p186 = pneg %p185
    // Predicated region
    $region9: #{gcn_forward.1} parent=5 // pred_check
      _
    $region10: #{gcn_forward.1} parent=5 // pred_check_branch
      %188 = sbr.rel (%p185) target = $region12
    $region11: #{gcn_forward.1} parent=5 // pred_region
      %s189 = ssub.s32 %s12, 1
      // Predicated region
      $region13: #{gcn_forward.1} parent=11 // pred_check
        %p190 = pneg %p33
      $region14: #{gcn_forward.1} parent=11 // pred_check_branch
        %192 = sbr.rel (%p190) target = $region16
      $region15: #{gcn_forward.1} parent=11 // pred_region
        _
      $region16: #{gcn_forward.1} parent=11 // pred_fallthru
        _
      // Predicated region
      $region17: #{gcn_forward.1} parent=11 // pred_check
        %p193 = pneg %p54
      $region18: #{gcn_forward.1} parent=11 // pred_check_branch
        %195 = sbr.rel (%p193) target = $region20
      $region19: #{gcn_forward.1} parent=11 // pred_region
        _
      $region20: #{gcn_forward.1} parent=11 // pred_fallthru
        _
      // Predicated region
      $region21: #{gcn_forward.1} parent=11 // pred_check
        %p196 = pneg %p75
      $region22: #{gcn_forward.1} parent=11 // pred_check_branch
        %198 = sbr.rel (%p196) target = $region24
      $region23: #{gcn_forward.1} parent=11 // pred_region
        _
      $region24: #{gcn_forward.1} parent=11 // pred_fallthru
        _
      // Predicated region
      $region25: #{gcn_forward.1} parent=11 // pred_check
        %p199 = pneg %p96
      $region26: #{gcn_forward.1} parent=11 // pred_check_branch
        %201 = sbr.rel (%p199) target = $region28
      $region27: #{gcn_forward.1} parent=11 // pred_region
        _
      $region28: #{gcn_forward.1} parent=11 // pred_fallthru
        _
    $region12: #{gcn_forward.1} parent=5 // pred_fallthru
      _
    %p202 = scmp.lt.s32.totalorder %s12, 2
    // Predicated region
    $region29: #{gcn_forward.1} parent=5 // pred_check
      %p203 = pneg %p202
    $region30: #{gcn_forward.1} parent=5 // pred_check_branch
      %205 = sbr.rel (%p203) target = $region32
    $region31: #{gcn_forward.1} parent=5 // pred_region
      // Predicated region
      $region33: #{gcn_forward.1} parent=31 // pred_check
        %p206 = pneg %p122
      $region34: #{gcn_forward.1} parent=31 // pred_check_branch
        %208 = sbr.rel (%p206) target = $region36
      $region35: #{gcn_forward.1} parent=31 // pred_region
        %s209 = ssub.s32 %s12, 1
        %p210 = scmp.gt.s32.totalorder %s209, 0
        %s211 = scalar_select %p210, %s209, 0
        %p212 = scmp.lt.s32.totalorder %s211, 0
        %s213 = scalar_select %p212, %s211, 0
        %s214 = smul.addr %s213, 16
        %s215 = smul.addr %s214, 4
        %s216 = scalar_lea.vmem %s4, %s215
        %s217 = ssub.s32 %s12, 1
        %p218 = scmp.gt.s32.totalorder %s217, 0
        %s219 = scalar_select %p218, %s217, 0
      $region36: #{gcn_forward.1} parent=31 // pred_fallthru
        _
      // Predicated region
      $region37: #{gcn_forward.1} parent=31 // pred_check
        %p220 = pneg %p148
      $region38: #{gcn_forward.1} parent=31 // pred_check_branch
        %222 = sbr.rel (%p220) target = $region40
      $region39: #{gcn_forward.1} parent=31 // pred_region
        %p223 = scmp.lt.s32.totalorder %s12, 1
        %s224 = scalar_select %p223, %s12, 1
        %s225 = scalar_lea.vmem %s5, %s224
      $region40: #{gcn_forward.1} parent=31 // pred_fallthru
        _
    $region32: #{gcn_forward.1} parent=5 // pred_fallthru
      _
    %p226 = scmp.le.s32.totalorder 1, %s12
    %p227 = scmp.lt.s32.totalorder %s12, 3
    %p228 = pnand %p226, %p227
    %p229 = pneg %p228
    // Predicated region
    $region41: #{gcn_forward.1} parent=5 // pred_check
      _
    $region42: #{gcn_forward.1} parent=5 // pred_check_branch
      %231 = sbr.rel (%p228) target = $region44
    $region43: #{gcn_forward.1} parent=5 // pred_region
      %s232 = ssub.s32 %s12, 1
      %p233 = pneg %p33
      %p234 = pneg %p30
      %p235 = pneg %p54
      %p236 = pneg %p51
      %p237 = pneg %p75
      %p238 = pneg %p72
      %p239 = pneg %p96
      %p240 = pneg %p93
      %s241 = ssub.s32 %s17, 1
      %p242 = scmp.gt.s32.totalorder %s241, 0
      %s243 = scalar_select %p242, %s241, 0
      %p244 = scmp.lt.s32.totalorder %s243, 0
      %s245 = scalar_select %p244, %s243, 0
      %s246 = smul.addr %s245, 16
      %s247 = smul.addr %s246, 4
      %s248 = scalar_lea.vmem %s4, %s247
      %p249 = pneg %p128
      %p250 = pneg %p125
      %p251 = scmp.lt.s32.totalorder %s17, 1
      %s252 = scalar_select %p251, %s17, 1
      %s253 = scalar_lea.vmem %s5, %s252
      %p254 = pneg %p154
      %p255 = pneg %p151
      %p256 = pneg %p175
      %p257 = pneg %p172
      %s258 = ssub.s32 %s17, 1
      %p259 = scmp.gt.s32.totalorder %s258, 0
      %s260 = scalar_select %p259, %s258, 0
      %p261 = scmp.lt.s32.totalorder %s260, 0
      %s262 = scalar_select %p261, %s260, 0
      %s263 = smul.addr %s262, 16
      %s264 = smul.addr %s263, 4
      %s265 = scalar_lea.vmem %s4, %s264
      %s266 = ssub.s32 %s17, 1
      %p267 = scmp.gt.s32.totalorder %s266, 0
      %s268 = scalar_select %p267, %s266, 0
      %p269 = scmp.lt.s32.totalorder %s17, 1
      %s270 = scalar_select %p269, %s17, 1
      %s271 = scalar_lea.vmem %s5, %s270
      %p273 = scmp.eq.s32.totalorder %s17, 0
      // Predicated region
      $region45: #{gcn_forward.1} parent=43 // pred_check
        %p274 = pneg %p273
      $region46: #{gcn_forward.1} parent=43 // pred_check_branch
        %276 = sbr.rel (%p274) target = $region48
      $region47: #{gcn_forward.1} parent=43 // pred_region
        %v277 = vld [vmem:[%s1] sm:$0xf]
        %v278 = vld [vmem:[%s1 + $0x4] sm:$0xf]
        %v279 = vld [vmem:[%s1 + $0x8] sm:$0xf]
        %v280 = vld [vmem:[%s1 + $0xc] sm:$0xf]
        %v281 = vld [vmem:[%s1 + $0x10] sm:$0xf]
        %v282 = vld [vmem:[%s1 + $0x14] sm:$0xf]
        %v283 = vld [vmem:[%s1 + $0x18] sm:$0xf]
        %v284 = vld [vmem:[%s1 + $0x1c] sm:$0xf]
        %v285 = vld [vmem:[%s1 + $0x20] sm:$0xf]
        %v286 = vld [vmem:[%s1 + $0x24] sm:$0xf]
        %v287 = vld [vmem:[%s1 + $0x28] sm:$0xf]
        %v288 = vld [vmem:[%s1 + $0x2c] sm:$0xf]
        %v289 = vld [vmem:[%s1 + $0x30] sm:$0xf]
        %v290 = vld [vmem:[%s1 + $0x34] sm:$0xf]
        %v291 = vld [vmem:[%s1 + $0x38] sm:$0xf]
        %v292 = vld [vmem:[%s1 + $0x3c] sm:$0xf]
        %v309 = vunpack.c.l.b16 %v277
        %v310 = vunpack.c.l.b16 %v278
        %v311 = vunpack.c.l.b16 %v279
        %v312 = vunpack.c.l.b16 %v280
        %v313 = vunpack.c.l.b16 %v281
        %v314 = vunpack.c.l.b16 %v282
        %v315 = vunpack.c.l.b16 %v283
        %v316 = vunpack.c.l.b16 %v284
        %v317 = vunpack.c.l.b16 %v285
        %v318 = vunpack.c.l.b16 %v286
        %v319 = vunpack.c.l.b16 %v287
        %v320 = vunpack.c.l.b16 %v288
        %v321 = vunpack.c.l.b16 %v289
        %v322 = vunpack.c.l.b16 %v290
        %v323 = vunpack.c.l.b16 %v291
        %v324 = vunpack.c.l.b16 %v292
        %v325 = vpack.c.b16 %v310, %v309
        %v326 = vpack.c.b16 %v312, %v311
        %v327 = vpack.c.b16 %v314, %v313
        %v328 = vpack.c.b16 %v316, %v315
        %v329 = vpack.c.b16 %v318, %v317
        %v330 = vpack.c.b16 %v320, %v319
        %v331 = vpack.c.b16 %v322, %v321
        %v332 = vpack.c.b16 %v324, %v323
        %341 = vst [vmem:[#allocation3] sm:$0xff] %v325
        %342 = vst [vmem:[#allocation3 + $0x8] sm:$0xff] %v326
        %343 = vst [vmem:[#allocation3 + $0x10] sm:$0xff] %v327
        %344 = vst [vmem:[#allocation3 + $0x18] sm:$0xff] %v328
        %345 = vst [vmem:[#allocation3 + $0x20] sm:$0xff] %v329
        %346 = vst [vmem:[#allocation3 + $0x28] sm:$0xff] %v330
        %347 = vst [vmem:[#allocation3 + $0x30] sm:$0xff] %v331
        %348 = vst [vmem:[#allocation3 + $0x38] sm:$0xff] %v332
      $region48: #{gcn_forward.1} parent=43 // pred_fallthru
        _
      %p349 = scmp.ne.s32.totalorder %s17, 0
      // Predicated region
      $region49: #{gcn_forward.1} parent=43 // pred_check
        %p350 = pneg %p349
      $region50: #{gcn_forward.1} parent=43 // pred_check_branch
        %352 = sbr.rel (%p350) target = $region52
      $region51: #{gcn_forward.1} parent=43 // pred_region
        %v353 = vld [vmem:[#allocation2] sm:$0xff]
        %v354 = vld [vmem:[#allocation2 + $0x8] sm:$0xff]
        %v355 = vld [vmem:[#allocation2 + $0x10] sm:$0xff]
        %v356 = vld [vmem:[#allocation2 + $0x18] sm:$0xff]
        %v357 = vld [vmem:[#allocation2 + $0x20] sm:$0xff]
        %v358 = vld [vmem:[#allocation2 + $0x28] sm:$0xff]
        %v359 = vld [vmem:[#allocation2 + $0x30] sm:$0xff]
        %v360 = vld [vmem:[#allocation2 + $0x38] sm:$0xff]
        %v361 = vunpack.c.l.bf16 %v353
        %v362 = vunpack.c.h.bf16 %v353
        %v363 = vunpack.c.l.bf16 %v354
        %v364 = vunpack.c.h.bf16 %v354
        %v365 = vunpack.c.l.bf16 %v355
        %v366 = vunpack.c.h.bf16 %v355
        %v367 = vunpack.c.l.bf16 %v356
        %v368 = vunpack.c.h.bf16 %v356
        %v369 = vunpack.c.l.bf16 %v357
        %v370 = vunpack.c.h.bf16 %v357
        %v371 = vunpack.c.l.bf16 %v358
        %v372 = vunpack.c.h.bf16 %v358
        %v373 = vunpack.c.l.bf16 %v359
        %v374 = vunpack.c.h.bf16 %v359
        %v375 = vunpack.c.l.bf16 %v360
        %v376 = vunpack.c.h.bf16 %v360
        %v377 = vld [vmem:[%s2] sm:$0xff]
        %v378 = vld [vmem:[%s2 + $0x8] sm:$0xff]
        %v379 = vld [vmem:[%s2 + $0x10] sm:$0xff]
        %v380 = vld [vmem:[%s2 + $0x18] sm:$0xff]
        %v381 = vld [vmem:[%s2 + $0x20] sm:$0xff]
        %v382 = vld [vmem:[%s2 + $0x28] sm:$0xff]
        %v383 = vld [vmem:[%s2 + $0x30] sm:$0xff]
        %v384 = vld [vmem:[%s2 + $0x38] sm:$0xff]
        %v385 = vld [vmem:[%s2 + $0x40] sm:$0xff]
        %v386 = vld [vmem:[%s2 + $0x48] sm:$0xff]
        %v387 = vld [vmem:[%s2 + $0x50] sm:$0xff]
        %v388 = vld [vmem:[%s2 + $0x58] sm:$0xff]
        %v389 = vld [vmem:[%s2 + $0x60] sm:$0xff]
        %v390 = vld [vmem:[%s2 + $0x68] sm:$0xff]
        %v391 = vld [vmem:[%s2 + $0x70] sm:$0xff]
        %v392 = vld [vmem:[%s2 + $0x78] sm:$0xff]
        %394 = vset.pattern.permute.xlu0 0
        %395 = vperm.xlu0 %394, %v377
        %v396 = vpop.permute.xlu0 %395
        %399 = vset.pattern.permute.xlu0 0
        %400 = vperm.xlu0 %399, %v378
        %v401 = vpop.permute.xlu0 %400
        %404 = vset.pattern.permute.xlu0 0
        %405 = vperm.xlu0 %404, %v379
        %v406 = vpop.permute.xlu0 %405
        %409 = vset.pattern.permute.xlu0 0
        %410 = vperm.xlu0 %409, %v380
        %v411 = vpop.permute.xlu0 %410
        %414 = vset.pattern.permute.xlu0 0
        %415 = vperm.xlu0 %414, %v381
        %v416 = vpop.permute.xlu0 %415
        %419 = vset.pattern.permute.xlu0 0
        %420 = vperm.xlu0 %419, %v382
        %v421 = vpop.permute.xlu0 %420
        %424 = vset.pattern.permute.xlu0 0
        %425 = vperm.xlu0 %424, %v383
        %v426 = vpop.permute.xlu0 %425
        %429 = vset.pattern.permute.xlu0 0
        %430 = vperm.xlu0 %429, %v384
        %v431 = vpop.permute.xlu0 %430
        %434 = vset.pattern.permute.xlu0 0
        %435 = vperm.xlu0 %434, %v385
        %v436 = vpop.permute.xlu0 %435
        %439 = vset.pattern.permute.xlu0 0
        %440 = vperm.xlu0 %439, %v386
        %v441 = vpop.permute.xlu0 %440
        %444 = vset.pattern.permute.xlu0 0
        %445 = vperm.xlu0 %444, %v387
        %v446 = vpop.permute.xlu0 %445
        %449 = vset.pattern.permute.xlu0 0
        %450 = vperm.xlu0 %449, %v388
        %v451 = vpop.permute.xlu0 %450
        %454 = vset.pattern.permute.xlu0 0
        %455 = vperm.xlu0 %454, %v389
        %v456 = vpop.permute.xlu0 %455
        %459 = vset.pattern.permute.xlu0 0
        %460 = vperm.xlu0 %459, %v390
        %v461 = vpop.permute.xlu0 %460
        %464 = vset.pattern.permute.xlu0 0
        %465 = vperm.xlu0 %464, %v391
        %v466 = vpop.permute.xlu0 %465
        %469 = vset.pattern.permute.xlu0 0
        %470 = vperm.xlu0 %469, %v392
        %v471 = vpop.permute.xlu0 %470
        %v473 = vmul.f32 %v361, %v396
        %v474 = vmul.f32 %v362, %v401
        %v475 = vmul.f32 %v363, %v406
        %v476 = vmul.f32 %v364, %v411
        %v477 = vmul.f32 %v365, %v416
        %v478 = vmul.f32 %v366, %v421
        %v479 = vmul.f32 %v367, %v426
        %v480 = vmul.f32 %v368, %v431
        %v481 = vmul.f32 %v369, %v436
        %v482 = vmul.f32 %v370, %v441
        %v483 = vmul.f32 %v371, %v446
        %v484 = vmul.f32 %v372, %v451
        %v485 = vmul.f32 %v373, %v456
        %v486 = vmul.f32 %v374, %v461
        %v487 = vmul.f32 %v375, %v466
        %v488 = vmul.f32 %v376, %v471
        %v489 = vpack.c.bf16 %v474, %v473
        %v490 = vpack.c.bf16 %v476, %v475
        %v491 = vpack.c.bf16 %v478, %v477
        %v492 = vpack.c.bf16 %v480, %v479
        %v493 = vpack.c.bf16 %v482, %v481
        %v494 = vpack.c.bf16 %v484, %v483
        %v495 = vpack.c.bf16 %v486, %v485
        %v496 = vpack.c.bf16 %v488, %v487
        %v497 = vld [vmem:[%s265] sm:$0xf]
        %v498 = vld [vmem:[%s265 + $0x4] sm:$0xf]
        %v499 = vld [vmem:[%s265 + $0x8] sm:$0xf]
        %v500 = vld [vmem:[%s265 + $0xc] sm:$0xf]
        %v501 = vld [vmem:[%s265 + $0x10] sm:$0xf]
        %v502 = vld [vmem:[%s265 + $0x14] sm:$0xf]
        %v503 = vld [vmem:[%s265 + $0x18] sm:$0xf]
        %v504 = vld [vmem:[%s265 + $0x1c] sm:$0xf]
        %v505 = vld [vmem:[%s265 + $0x20] sm:$0xf]
        %v506 = vld [vmem:[%s265 + $0x24] sm:$0xf]
        %v507 = vld [vmem:[%s265 + $0x28] sm:$0xf]
        %v508 = vld [vmem:[%s265 + $0x2c] sm:$0xf]
        %v509 = vld [vmem:[%s265 + $0x30] sm:$0xf]
        %v510 = vld [vmem:[%s265 + $0x34] sm:$0xf]
        %v511 = vld [vmem:[%s265 + $0x38] sm:$0xf]
        %v512 = vld [vmem:[%s265 + $0x3c] sm:$0xf]
        %v529 = vunpack.c.l.b16 %v497
        %v530 = vunpack.c.l.b16 %v498
        %v531 = vunpack.c.l.b16 %v499
        %v532 = vunpack.c.l.b16 %v500
        %v533 = vunpack.c.l.b16 %v501
        %v534 = vunpack.c.l.b16 %v502
        %v535 = vunpack.c.l.b16 %v503
        %v536 = vunpack.c.l.b16 %v504
        %v537 = vunpack.c.l.b16 %v505
        %v538 = vunpack.c.l.b16 %v506
        %v539 = vunpack.c.l.b16 %v507
        %v540 = vunpack.c.l.b16 %v508
        %v541 = vunpack.c.l.b16 %v509
        %v542 = vunpack.c.l.b16 %v510
        %v543 = vunpack.c.l.b16 %v511
        %v544 = vunpack.c.l.b16 %v512
        %v545 = vpack.c.b16 %v530, %v529
        %v546 = vpack.c.b16 %v532, %v531
        %v547 = vpack.c.b16 %v534, %v533
        %v548 = vpack.c.b16 %v536, %v535
        %v549 = vpack.c.b16 %v538, %v537
        %v550 = vpack.c.b16 %v540, %v539
        %v551 = vpack.c.b16 %v542, %v541
        %v552 = vpack.c.b16 %v544, %v543
        %561 = vmatprep.subr.bf16.mxu0 0
        %562 = vmatpush1.bf16.msra.mxu0 %v545
        %563 = vmatprep.subr.bf16.mxu0 0
        %564 = vmatpush1.bf16.msra.mxu0 %v546
        %565 = vmatprep.subr.bf16.mxu0 0
        %566 = vmatpush1.bf16.msra.mxu0 %v547
        %567 = vmatprep.subr.bf16.mxu0 0
        %568 = vmatpush1.bf16.msra.mxu0 %v548
        %569 = vmatprep.subr.bf16.mxu0 0
        %570 = vmatpush1.bf16.msra.mxu0 %v549
        %571 = vmatprep.subr.bf16.mxu0 0
        %572 = vmatpush1.bf16.msra.mxu0 %v550
        %573 = vmatprep.subr.bf16.mxu0 0
        %574 = vmatpush1.bf16.msra.mxu0 %v551
        %575 = vmatprep.subr.bf16.mxu0 0
        %576 = vmatpush1.bf16.msra.mxu0 %v552
        %577 = vmatprep.subr.bf16.mxu0 0
        %578 = vmatpush1.bf16.msra.mxu0 0
        %579 = vmatprep.subr.bf16.mxu0 0
        %580 = vmatpush1.bf16.msra.mxu0 0
        %581 = vmatprep.subr.bf16.mxu0 0
        %582 = vmatpush1.bf16.msra.mxu0 0
        %583 = vmatprep.subr.bf16.mxu0 0
        %584 = vmatpush1.bf16.msra.mxu0 0
        %585 = vmatprep.subr.bf16.mxu0 0
        %586 = vmatpush1.bf16.msra.mxu0 0
        %587 = vmatprep.subr.bf16.mxu0 0
        %588 = vmatpush1.bf16.msra.mxu0 0
        %589 = vmatprep.subr.bf16.mxu0 0
        %590 = vmatpush1.bf16.msra.mxu0 0
        %591 = vmatprep.subr.bf16.mxu0 0
        %592 = vmatpush1.bf16.msra.mxu0 0
        %593 = vmatprep.mubr.bf16.mxu0 0
        %594 = vmatmul.mubr.bf16.gmra.mrb[0].mxu0 %v489
        %v595 = vpop.f32.mrb[0].mxu0
        %v596 = vadd.f32 0.0, %v595
        %v597 = vpop.f32.mrb[0].mxu0
        %v598 = vpop.f32.mrb[0].mxu0
        %v599 = vadd.f32 0.0, %v598
        %v600 = vpop.f32.mrb[0].mxu0
        %601 = vmatprep.mubr.bf16.mxu0 0
        %602 = vmatmul.mubr.bf16.gmra.mrb[0].mxu0 %v490
        %v603 = vpop.f32.mrb[0].mxu0
        %v604 = vadd.f32 0.0, %v603
        %v605 = vpop.f32.mrb[0].mxu0
        %v606 = vpop.f32.mrb[0].mxu0
        %v607 = vadd.f32 0.0, %v606
        %v608 = vpop.f32.mrb[0].mxu0
        %609 = vmatprep.mubr.bf16.mxu0 0
        %610 = vmatmul.mubr.bf16.gmra.mrb[0].mxu0 %v491
        %v611 = vpop.f32.mrb[0].mxu0
        %v612 = vadd.f32 0.0, %v611
        %v613 = vpop.f32.mrb[0].mxu0
        %v614 = vpop.f32.mrb[0].mxu0
        %v615 = vadd.f32 0.0, %v614
        %v616 = vpop.f32.mrb[0].mxu0
        %617 = vmatprep.mubr.bf16.mxu0 0
        %618 = vmatmul.mubr.bf16.gmra.mrb[0].mxu0 %v492
        %v619 = vpop.f32.mrb[0].mxu0
        %v620 = vadd.f32 0.0, %v619
        %v621 = vpop.f32.mrb[0].mxu0
        %v622 = vpop.f32.mrb[0].mxu0
        %v623 = vadd.f32 0.0, %v622
        %v624 = vpop.f32.mrb[0].mxu0
        %625 = vmatprep.mubr.bf16.mxu0 0
        %626 = vmatmul.mubr.bf16.gmra.mrb[0].mxu0 %v493
        %v627 = vpop.f32.mrb[0].mxu0
        %v628 = vadd.f32 0.0, %v627
        %v629 = vpop.f32.mrb[0].mxu0
        %v630 = vpop.f32.mrb[0].mxu0
        %v631 = vadd.f32 0.0, %v630
        %v632 = vpop.f32.mrb[0].mxu0
        %633 = vmatprep.mubr.bf16.mxu0 0
        %634 = vmatmul.mubr.bf16.gmra.mrb[0].mxu0 %v494
        %v635 = vpop.f32.mrb[0].mxu0
        %v636 = vadd.f32 0.0, %v635
        %v637 = vpop.f32.mrb[0].mxu0
        %v638 = vpop.f32.mrb[0].mxu0
        %v639 = vadd.f32 0.0, %v638
        %v640 = vpop.f32.mrb[0].mxu0
        %641 = vmatprep.mubr.bf16.mxu0 0
        %642 = vmatmul.mubr.bf16.gmra.mrb[0].mxu0 %v495
        %v643 = vpop.f32.mrb[0].mxu0
        %v644 = vadd.f32 0.0, %v643
        %v645 = vpop.f32.mrb[0].mxu0
        %v646 = vpop.f32.mrb[0].mxu0
        %v647 = vadd.f32 0.0, %v646
        %v648 = vpop.f32.mrb[0].mxu0
        %649 = vmatprep.mubr.bf16.mxu0 0
        %650 = vmatmul.mubr.bf16.gmra.mrb[0].mxu0 %v496
        %v651 = vpop.f32.mrb[0].mxu0
        %v652 = vadd.f32 0.0, %v651
        %v653 = vpop.f32.mrb[0].mxu0
        %v654 = vpop.f32.mrb[0].mxu0
        %v655 = vadd.f32 0.0, %v654
        %v656 = vpop.f32.mrb[0].mxu0
        %657 = vdwg.mxu0
        %v658 = vpack.c.bf16 %v599, %v596
        %v659 = vpack.c.bf16 %v607, %v604
        %v660 = vpack.c.bf16 %v615, %v612
        %v661 = vpack.c.bf16 %v623, %v620
        %v662 = vpack.c.bf16 %v631, %v628
        %v663 = vpack.c.bf16 %v639, %v636
        %v664 = vpack.c.bf16 %v647, %v644
        %v665 = vpack.c.bf16 %v655, %v652
        %666 = vst [vmem:[#allocation3] sm:$0xff] %v658
        %667 = vst [vmem:[#allocation3 + $0x8] sm:$0xff] %v659
        %668 = vst [vmem:[#allocation3 + $0x10] sm:$0xff] %v660
        %669 = vst [vmem:[#allocation3 + $0x18] sm:$0xff] %v661
        %670 = vst [vmem:[#allocation3 + $0x20] sm:$0xff] %v662
        %671 = vst [vmem:[#allocation3 + $0x28] sm:$0xff] %v663
        %672 = vst [vmem:[#allocation3 + $0x30] sm:$0xff] %v664
        %673 = vst [vmem:[#allocation3 + $0x38] sm:$0xff] %v665
      $region52: #{gcn_forward.1} parent=43 // pred_fallthru
        _
      %v674 = vld [vmem:[%s0] sm:$0xf]
      %v675 = vld [vmem:[%s0 + $0x4] sm:$0xf]
      %v676 = vld [vmem:[%s0 + $0x8] sm:$0xf]
      %v677 = vld [vmem:[%s0 + $0xc] sm:$0xf]
      %v678 = vld [vmem:[%s0 + $0x10] sm:$0xf]
      %v679 = vld [vmem:[%s0 + $0x14] sm:$0xf]
      %v680 = vld [vmem:[%s0 + $0x18] sm:$0xf]
      %v681 = vld [vmem:[%s0 + $0x1c] sm:$0xf]
      %v682 = vld [vmem:[%s0 + $0x20] sm:$0xf]
      %v683 = vld [vmem:[%s0 + $0x24] sm:$0xf]
      %v684 = vld [vmem:[%s0 + $0x28] sm:$0xf]
      %v685 = vld [vmem:[%s0 + $0x2c] sm:$0xf]
      %v686 = vld [vmem:[%s0 + $0x30] sm:$0xf]
      %v687 = vld [vmem:[%s0 + $0x34] sm:$0xf]
      %v688 = vld [vmem:[%s0 + $0x38] sm:$0xf]
      %v689 = vld [vmem:[%s0 + $0x3c] sm:$0xf]
      %v690 = vld [vmem:[#allocation3] sm:$0xff]
      %v691 = vld [vmem:[#allocation3 + $0x8] sm:$0xff]
      %v692 = vld [vmem:[#allocation3 + $0x10] sm:$0xff]
      %v693 = vld [vmem:[#allocation3 + $0x18] sm:$0xff]
      %v694 = vld [vmem:[#allocation3 + $0x20] sm:$0xff]
      %v695 = vld [vmem:[#allocation3 + $0x28] sm:$0xff]
      %v696 = vld [vmem:[#allocation3 + $0x30] sm:$0xff]
      %v697 = vld [vmem:[#allocation3 + $0x38] sm:$0xff]
      %v714 = vunpack.c.l.b16 %v674
      %v715 = vunpack.c.l.b16 %v675
      %v716 = vunpack.c.l.b16 %v676
      %v717 = vunpack.c.l.b16 %v677
      %v718 = vunpack.c.l.b16 %v678
      %v719 = vunpack.c.l.b16 %v679
      %v720 = vunpack.c.l.b16 %v680
      %v721 = vunpack.c.l.b16 %v681
      %v722 = vunpack.c.l.b16 %v682
      %v723 = vunpack.c.l.b16 %v683
      %v724 = vunpack.c.l.b16 %v684
      %v725 = vunpack.c.l.b16 %v685
      %v726 = vunpack.c.l.b16 %v686
      %v727 = vunpack.c.l.b16 %v687
      %v728 = vunpack.c.l.b16 %v688
      %v729 = vunpack.c.l.b16 %v689
      %v730 = vpack.c.b16 %v715, %v714
      %v731 = vpack.c.b16 %v717, %v716
      %v732 = vpack.c.b16 %v719, %v718
      %v733 = vpack.c.b16 %v721, %v720
      %v734 = vpack.c.b16 %v723, %v722
      %v735 = vpack.c.b16 %v725, %v724
      %v736 = vpack.c.b16 %v727, %v726
      %v737 = vpack.c.b16 %v729, %v728
      %746 = vmatprep.subr.bf16.mxu0 0
      %747 = vmatpush1.bf16.msra.mxu0 %v690
      %748 = vmatprep.subr.bf16.mxu0 0
      %749 = vmatpush1.bf16.msra.mxu0 %v691
      %750 = vmatprep.subr.bf16.mxu0 0
      %751 = vmatpush1.bf16.msra.mxu0 %v692
      %752 = vmatprep.subr.bf16.mxu0 0
      %753 = vmatpush1.bf16.msra.mxu0 %v693
      %754 = vmatprep.subr.bf16.mxu0 0
      %755 = vmatpush1.bf16.msra.mxu0 %v694
      %756 = vmatprep.subr.bf16.mxu0 0
      %757 = vmatpush1.bf16.msra.mxu0 %v695
      %758 = vmatprep.subr.bf16.mxu0 0
      %759 = vmatpush1.bf16.msra.mxu0 %v696
      %760 = vmatprep.subr.bf16.mxu0 0
      %761 = vmatpush1.bf16.msra.mxu0 %v697
      %762 = vmatprep.subr.bf16.mxu0 0
      %763 = vmatpush1.bf16.msra.mxu0 0
      %764 = vmatprep.subr.bf16.mxu0 0
      %765 = vmatpush1.bf16.msra.mxu0 0
      %766 = vmatprep.subr.bf16.mxu0 0
      %767 = vmatpush1.bf16.msra.mxu0 0
      %768 = vmatprep.subr.bf16.mxu0 0
      %769 = vmatpush1.bf16.msra.mxu0 0
      %770 = vmatprep.subr.bf16.mxu0 0
      %771 = vmatpush1.bf16.msra.mxu0 0
      %772 = vmatprep.subr.bf16.mxu0 0
      %773 = vmatpush1.bf16.msra.mxu0 0
      %774 = vmatprep.subr.bf16.mxu0 0
      %775 = vmatpush1.bf16.msra.mxu0 0
      %776 = vmatprep.subr.bf16.mxu0 0
      %777 = vmatpush1.bf16.msra.mxu0 0
      %778 = vmatprep.mubr.bf16.mxu0 0
      %779 = vmatmul.mubr.bf16.gmra.mrb[0].mxu0 %v730
      %v780 = vpop.f32.mrb[0].mxu0
      %v781 = vadd.f32 0.0, %v780
      %v782 = vpop.f32.mrb[0].mxu0
      %v783 = vpop.f32.mrb[0].mxu0
      %v784 = vadd.f32 0.0, %v783
      %v785 = vpop.f32.mrb[0].mxu0
      %786 = vmatprep.mubr.bf16.mxu0 0
      %787 = vmatmul.mubr.bf16.gmra.mrb[0].mxu0 %v731
      %v788 = vpop.f32.mrb[0].mxu0
      %v789 = vadd.f32 0.0, %v788
      %v790 = vpop.f32.mrb[0].mxu0
      %v791 = vpop.f32.mrb[0].mxu0
      %v792 = vadd.f32 0.0, %v791
      %v793 = vpop.f32.mrb[0].mxu0
      %794 = vmatprep.mubr.bf16.mxu0 0
      %795 = vmatmul.mubr.bf16.gmra.mrb[0].mxu0 %v732
      %v796 = vpop.f32.mrb[0].mxu0
      %v797 = vadd.f32 0.0, %v796
      %v798 = vpop.f32.mrb[0].mxu0
      %v799 = vpop.f32.mrb[0].mxu0
      %v800 = vadd.f32 0.0, %v799
      %v801 = vpop.f32.mrb[0].mxu0
      %802 = vmatprep.mubr.bf16.mxu0 0
      %803 = vmatmul.mubr.bf16.gmra.mrb[0].mxu0 %v733
      %v804 = vpop.f32.mrb[0].mxu0
      %v805 = vadd.f32 0.0, %v804
      %v806 = vpop.f32.mrb[0].mxu0
      %v807 = vpop.f32.mrb[0].mxu0
      %v808 = vadd.f32 0.0, %v807
      %v809 = vpop.f32.mrb[0].mxu0
      %810 = vmatprep.mubr.bf16.mxu0 0
      %811 = vmatmul.mubr.bf16.gmra.mrb[0].mxu0 %v734
      %v812 = vpop.f32.mrb[0].mxu0
      %v813 = vadd.f32 0.0, %v812
      %v814 = vpop.f32.mrb[0].mxu0
      %v815 = vpop.f32.mrb[0].mxu0
      %v816 = vadd.f32 0.0, %v815
      %v817 = vpop.f32.mrb[0].mxu0
      %818 = vmatprep.mubr.bf16.mxu0 0
      %819 = vmatmul.mubr.bf16.gmra.mrb[0].mxu0 %v735
      %v820 = vpop.f32.mrb[0].mxu0
      %v821 = vadd.f32 0.0, %v820
      %v822 = vpop.f32.mrb[0].mxu0
      %v823 = vpop.f32.mrb[0].mxu0
      %v824 = vadd.f32 0.0, %v823
      %v825 = vpop.f32.mrb[0].mxu0
      %826 = vmatprep.mubr.bf16.mxu0 0
      %827 = vmatmul.mubr.bf16.gmra.mrb[0].mxu0 %v736
      %v828 = vpop.f32.mrb[0].mxu0
      %v829 = vadd.f32 0.0, %v828
      %v830 = vpop.f32.mrb[0].mxu0
      %v831 = vpop.f32.mrb[0].mxu0
      %v832 = vadd.f32 0.0, %v831
      %v833 = vpop.f32.mrb[0].mxu0
      %834 = vmatprep.mubr.bf16.mxu0 0
      %835 = vmatmul.mubr.bf16.gmra.mrb[0].mxu0 %v737
      %v836 = vpop.f32.mrb[0].mxu0
      %v837 = vadd.f32 0.0, %v836
      %v838 = vpop.f32.mrb[0].mxu0
      %v839 = vpop.f32.mrb[0].mxu0
      %v840 = vadd.f32 0.0, %v839
      %v841 = vpop.f32.mrb[0].mxu0
      %842 = vdwg.mxu0
      %v843 = vld [vmem:[%s3] sm:$0xff]
      %v844 = vld [vmem:[%s3 + $0x8] sm:$0xff]
      %v845 = vld [vmem:[%s3 + $0x10] sm:$0xff]
      %v846 = vld [vmem:[%s3 + $0x18] sm:$0xff]
      %v847 = vld [vmem:[%s3 + $0x20] sm:$0xff]
      %v848 = vld [vmem:[%s3 + $0x28] sm:$0xff]
      %v849 = vld [vmem:[%s3 + $0x30] sm:$0xff]
      %v850 = vld [vmem:[%s3 + $0x38] sm:$0xff]
      %v851 = vld [vmem:[%s3 + $0x40] sm:$0xff]
      %v852 = vld [vmem:[%s3 + $0x48] sm:$0xff]
      %v853 = vld [vmem:[%s3 + $0x50] sm:$0xff]
      %v854 = vld [vmem:[%s3 + $0x58] sm:$0xff]
      %v855 = vld [vmem:[%s3 + $0x60] sm:$0xff]
      %v856 = vld [vmem:[%s3 + $0x68] sm:$0xff]
      %v857 = vld [vmem:[%s3 + $0x70] sm:$0xff]
      %v858 = vld [vmem:[%s3 + $0x78] sm:$0xff]
      %860 = vset.pattern.permute.xlu0 0
      %861 = vperm.xlu0 %860, %v843
      %v862 = vpop.permute.xlu0 %861
      %865 = vset.pattern.permute.xlu0 0
      %866 = vperm.xlu0 %865, %v844
      %v867 = vpop.permute.xlu0 %866
      %870 = vset.pattern.permute.xlu0 0
      %871 = vperm.xlu0 %870, %v845
      %v872 = vpop.permute.xlu0 %871
      %875 = vset.pattern.permute.xlu0 0
      %876 = vperm.xlu0 %875, %v846
      %v877 = vpop.permute.xlu0 %876
      %880 = vset.pattern.permute.xlu0 0
      %881 = vperm.xlu0 %880, %v847
      %v882 = vpop.permute.xlu0 %881
      %885 = vset.pattern.permute.xlu0 0
      %886 = vperm.xlu0 %885, %v848
      %v887 = vpop.permute.xlu0 %886
      %890 = vset.pattern.permute.xlu0 0
      %891 = vperm.xlu0 %890, %v849
      %v892 = vpop.permute.xlu0 %891
      %895 = vset.pattern.permute.xlu0 0
      %896 = vperm.xlu0 %895, %v850
      %v897 = vpop.permute.xlu0 %896
      %900 = vset.pattern.permute.xlu0 0
      %901 = vperm.xlu0 %900, %v851
      %v902 = vpop.permute.xlu0 %901
      %905 = vset.pattern.permute.xlu0 0
      %906 = vperm.xlu0 %905, %v852
      %v907 = vpop.permute.xlu0 %906
      %910 = vset.pattern.permute.xlu0 0
      %911 = vperm.xlu0 %910, %v853
      %v912 = vpop.permute.xlu0 %911
      %915 = vset.pattern.permute.xlu0 0
      %916 = vperm.xlu0 %915, %v854
      %v917 = vpop.permute.xlu0 %916
      %920 = vset.pattern.permute.xlu0 0
      %921 = vperm.xlu0 %920, %v855
      %v922 = vpop.permute.xlu0 %921
      %925 = vset.pattern.permute.xlu0 0
      %926 = vperm.xlu0 %925, %v856
      %v927 = vpop.permute.xlu0 %926
      %930 = vset.pattern.permute.xlu0 0
      %931 = vperm.xlu0 %930, %v857
      %v932 = vpop.permute.xlu0 %931
      %935 = vset.pattern.permute.xlu0 0
      %936 = vperm.xlu0 %935, %v858
      %v937 = vpop.permute.xlu0 %936
      %v939 = vmul.f32 %v862, %v781
      %v940 = vmul.f32 %v867, %v784
      %v941 = vmul.f32 %v872, %v789
      %v942 = vmul.f32 %v877, %v792
      %v943 = vmul.f32 %v882, %v797
      %v944 = vmul.f32 %v887, %v800
      %v945 = vmul.f32 %v892, %v805
      %v946 = vmul.f32 %v897, %v808
      %v947 = vmul.f32 %v902, %v813
      %v948 = vmul.f32 %v907, %v816
      %v949 = vmul.f32 %v912, %v821
      %v950 = vmul.f32 %v917, %v824
      %v951 = vmul.f32 %v922, %v829
      %v952 = vmul.f32 %v927, %v832
      %v953 = vmul.f32 %v932, %v837
      %v954 = vmul.f32 %v937, %v840
      %v955 = vld [vmem:[%s271] sm:$0x1]
      %v957 = vlaneseq
      %v958 = vshrl.u32 %v957, 7
      %v959 = vsub.s32 0, %v958
      %v960 = vrot.slane %v955, %v959
      %v962 = vadd.f32 %v939, %v960
      %v963 = vadd.f32 %v940, %v960
      %v964 = vadd.f32 %v941, %v960
      %v965 = vadd.f32 %v942, %v960
      %v966 = vadd.f32 %v943, %v960
      %v967 = vadd.f32 %v944, %v960
      %v968 = vadd.f32 %v945, %v960
      %v969 = vadd.f32 %v946, %v960
      %v970 = vadd.f32 %v947, %v960
      %v971 = vadd.f32 %v948, %v960
      %v972 = vadd.f32 %v949, %v960
      %v973 = vadd.f32 %v950, %v960
      %v974 = vadd.f32 %v951, %v960
      %v975 = vadd.f32 %v952, %v960
      %v976 = vadd.f32 %v953, %v960
      %v977 = vadd.f32 %v954, %v960
      %p978 = scmp.ne.s32.totalorder %s17, 1
      // Predicated region
      $region53: #{gcn_forward.1} parent=43 // pred_check
        %p979 = pneg %p978
      $region54: #{gcn_forward.1} parent=43 // pred_check_branch
        %981 = sbr.rel (%p979) target = $region56
      $region55: #{gcn_forward.1} parent=43 // pred_region
        %v982 = vmax.f32 %v962, 0.0
        %v983 = vmax.f32 %v963, 0.0
        %v984 = vmax.f32 %v964, 0.0
        %v985 = vmax.f32 %v965, 0.0
        %v986 = vmax.f32 %v966, 0.0
        %v987 = vmax.f32 %v967, 0.0
        %v988 = vmax.f32 %v968, 0.0
        %v989 = vmax.f32 %v969, 0.0
        %v990 = vmax.f32 %v970, 0.0
        %v991 = vmax.f32 %v971, 0.0
        %v992 = vmax.f32 %v972, 0.0
        %v993 = vmax.f32 %v973, 0.0
        %v994 = vmax.f32 %v974, 0.0
        %v995 = vmax.f32 %v975, 0.0
        %v996 = vmax.f32 %v976, 0.0
        %v997 = vmax.f32 %v977, 0.0
        %v998 = vpack.c.bf16 %v983, %v982
        %v999 = vpack.c.bf16 %v985, %v984
        %v1000 = vpack.c.bf16 %v987, %v986
        %v1001 = vpack.c.bf16 %v989, %v988
        %v1002 = vpack.c.bf16 %v991, %v990
        %v1003 = vpack.c.bf16 %v993, %v992
        %v1004 = vpack.c.bf16 %v995, %v994
        %v1005 = vpack.c.bf16 %v997, %v996
        %1006 = vst [vmem:[#allocation2] sm:$0xff] %v998
        %1007 = vst [vmem:[#allocation2 + $0x8] sm:$0xff] %v999
        %1008 = vst [vmem:[#allocation2 + $0x10] sm:$0xff] %v1000
        %1009 = vst [vmem:[#allocation2 + $0x18] sm:$0xff] %v1001
        %1010 = vst [vmem:[#allocation2 + $0x20] sm:$0xff] %v1002
        %1011 = vst [vmem:[#allocation2 + $0x28] sm:$0xff] %v1003
        %1012 = vst [vmem:[#allocation2 + $0x30] sm:$0xff] %v1004
        %1013 = vst [vmem:[#allocation2 + $0x38] sm:$0xff] %v1005
      $region56: #{gcn_forward.1} parent=43 // pred_fallthru
        _
      %p1014 = scmp.eq.s32.totalorder %s17, 1
      // Predicated region
      $region57: #{gcn_forward.1} parent=43 // pred_check
        %p1015 = pneg %p1014
      $region58: #{gcn_forward.1} parent=43 // pred_check_branch
        %1017 = sbr.rel (%p1015) target = $region60
      $region59: #{gcn_forward.1} parent=43 // pred_region
        %1018 = vst [vmem:[%s6] sm:$0xff] %v962
        %1019 = vst [vmem:[%s6 + $0x8] sm:$0xff] %v963
        %1020 = vst [vmem:[%s6 + $0x10] sm:$0xff] %v964
        %1021 = vst [vmem:[%s6 + $0x18] sm:$0xff] %v965
        %1022 = vst [vmem:[%s6 + $0x20] sm:$0xff] %v966
        %1023 = vst [vmem:[%s6 + $0x28] sm:$0xff] %v967
        %1024 = vst [vmem:[%s6 + $0x30] sm:$0xff] %v968
        %1025 = vst [vmem:[%s6 + $0x38] sm:$0xff] %v969
        %1026 = vst [vmem:[%s6 + $0x40] sm:$0xff] %v970
        %1027 = vst [vmem:[%s6 + $0x48] sm:$0xff] %v971
        %1028 = vst [vmem:[%s6 + $0x50] sm:$0xff] %v972
        %1029 = vst [vmem:[%s6 + $0x58] sm:$0xff] %v973
        %1030 = vst [vmem:[%s6 + $0x60] sm:$0xff] %v974
        %1031 = vst [vmem:[%s6 + $0x68] sm:$0xff] %v975
        %1032 = vst [vmem:[%s6 + $0x70] sm:$0xff] %v976
        %1033 = vst [vmem:[%s6 + $0x78] sm:$0xff] %v977
      $region60: #{gcn_forward.1} parent=43 // pred_fallthru
        _
      // Predicated region
      $region61: #{gcn_forward.1} parent=43 // pred_check
        %p1034 = pneg %p172
      $region62: #{gcn_forward.1} parent=43 // pred_check_branch
        %1036 = sbr.rel (%p1034) target = $region64
      $region63: #{gcn_forward.1} parent=43 // pred_region
        _
      $region64: #{gcn_forward.1} parent=43 // pred_fallthru
        _
      // Predicated region
      $region65: #{gcn_forward.1} parent=43 // pred_check
        %p1037 = pneg %p172
      $region66: #{gcn_forward.1} parent=43 // pred_check_branch
        %1039 = sbr.rel (%p1037) target = $region68
      $region67: #{gcn_forward.1} parent=43 // pred_region
        _
      $region68: #{gcn_forward.1} parent=43 // pred_fallthru
        _
    $region44: #{gcn_forward.1} parent=5 // pred_fallthru
      _
    %p1040 = scmp.le.s32.totalorder 2, %s12
    // Predicated region
    $region69: #{gcn_forward.1} parent=5 // pred_check
      %p1041 = pneg %p1040
    $region70: #{gcn_forward.1} parent=5 // pred_check_branch
      %1043 = sbr.rel (%p1041) target = $region72
    $region71: #{gcn_forward.1} parent=5 // pred_region
      %s1044 = ssub.s32 %s12, 2
    $region72: #{gcn_forward.1} parent=5 // pred_fallthru
      _
  $region6: #{gcn_forward.1} parent=0 // loop_footer
    %s16 = sadd.s32 1, %s12
  $region7: #{gcn_forward.1} parent=0 // loop_footer_branch
    %11 = sbr.rel target = $region3
  $region8: #{gcn_forward.1} parent=0 // loop_exit
    _

</llo_original>
